<compile_context>
chip_gen: v6e
topology: v6e:2x2x1
jax: 0.10.0
libtpu: 0.0.40
codegen_flags: <defaults>
</compile_context>

<pallas_src>
import math

import jax
import jax.numpy as jnp
from jax.experimental import pallas as pl
from jax.experimental.pallas import tpu as pltpu


def _round_up(n: int, m: int) -> int:
    return ((n + m - 1) // m) * m


def _sublane(itemsize: int) -> int:
    return {4: 8, 2: 16, 1: 32}.get(itemsize, 8)


def _vmem_limit_bytes() -> int:
    phys = 64 * 1024 * 1024                      # conservative default (v7x per-TC)
    try:
        phys = int(getattr(pltpu.get_tpu_info(), "vmem_capacity_bytes", phys))
    except Exception:
        pass
    # 64 MiB on v5e/v6e (128 MiB physical), 32 MiB on v7x (64 MiB physical).
    return min(phys // 2, 64 * 1024 * 1024)


# ---------------------------------------------------------------------------
# Kernels
# ---------------------------------------------------------------------------
def _noisy_resident_kernel(x_ref, wmu_ref, wsig_ref, eo_ref, ei_ref, b_ref,
                           o_ref, w_eff):
    # Hoisted effective-weight build: once per out tile (the batch axis is the
    # inner "arbitrary" grid axis), reused from VMEM by every batch tile.
    @pl.when(pl.program_id(1) == 0)
    def _():
        w_eff[...] = wmu_ref[...] + wsig_ref[...] * (eo_ref[...] * ei_ref[...])

    acc = jax.lax.dot_general(                   # (b_tile, out_tile), f32 acc
        x_ref[...], w_eff[...], (((1,), (1,)), ((), ())),
        preferred_element_type=jnp.float32)
    o_ref[...] = (acc + b_ref[...]).astype(o_ref.dtype)


def _plain_resident_kernel(x_ref, wmu_ref, b_ref, o_ref):
    # Eval mode: weight = weight_mu, bias = bias_mu (no epsilon traffic).
    acc = jax.lax.dot_general(
        x_ref[...], wmu_ref[...], (((1,), (1,)), ((), ())),
        preferred_element_type=jnp.float32)
    o_ref[...] = (acc + b_ref[...]).astype(o_ref.dtype)


def _noisy_ktiled_kernel(x_ref, wmu_ref, wsig_ref, eo_ref, ei_ref, b_ref,
                         o_ref, acc_ref):
    ki = pl.program_id(2)

    @pl.when(ki == 0)
    def _():
        acc_ref[...] = jnp.zeros_like(acc_ref)

    # Per-K-tile rank-1 rebuild; hidden behind the weight-tile DMA in the
    # HBM-bound wide-layer regime.
    w = wmu_ref[...] + wsig_ref[...] * (eo_ref[...] * ei_ref[...])
    acc_ref[...] += jax.lax.dot_general(
        x_ref[...], w, (((1,), (1,)), ((), ())),
        preferred_element_type=jnp.float32)

    @pl.when(ki == pl.num_programs(2) - 1)
    def _():
        o_ref[...] = (acc_ref[...] + b_ref[...]).astype(o_ref.dtype)


def _plain_ktiled_kernel(x_ref, wmu_ref, b_ref, o_ref, acc_ref):
    ki = pl.program_id(2)

    @pl.when(ki == 0)
    def _():
        acc_ref[...] = jnp.zeros_like(acc_ref)

    acc_ref[...] += jax.lax.dot_general(
        x_ref[...], wmu_ref[...], (((1,), (1,)), ((), ())),
        preferred_element_type=jnp.float32)

    @pl.when(ki == pl.num_programs(2) - 1)
    def _():
        o_ref[...] = (acc_ref[...] + b_ref[...]).astype(o_ref.dtype)


# ---------------------------------------------------------------------------
# Tile selection (generation-aware VMEM budgeting)
# ---------------------------------------------------------------------------
def _resident_vmem_bytes(bt, ot, in_p, ci, oi_):
    wdma = 2 * 2 * ot * in_p * ci                # w_mu + w_sigma, double-buffered
    wscr = ot * in_p * ci                        # hoisted effective-weight scratch
    xdma = 2 * bt * in_p * ci                    # x tile, double-buffered
    odma = 2 * bt * ot * oi_                     # output tile, double-buffered
    misc = 2 * (ot * 512 + in_p * 32 + ot * 8)   # eps/bias rows (vreg-padded, approx)
    return wdma + wscr + xdma + odma + misc


def _ktiled_vmem_bytes(bt, ot, kt, ci, oi_):
    wdma = 2 * 2 * ot * kt * ci
    xdma = 2 * bt * kt * ci
    acc = bt * ot * 4
    odma = 2 * bt * ot * oi_
    misc = 2 * (ot * 512 + kt * 32 + ot * 8)
    return wdma + xdma + acc + odma + misc


def _batch_tile_candidates(B, sub, cap=512):
    cands = []
    bt = min(cap, max(sub, _round_up(B, sub)))
    while bt >= sub:
        if bt not in cands:
            cands.append(bt)
        if bt == sub:
            break
        bt = max(sub, _round_up(bt // 2, sub))
    return cands


def _fit_resident(B, in_p, out_p, ci, oi_, budget):
    sub = _sublane(ci)
    out_cands = [c for c in (512, 256, 128) if out_p % c == 0] or [128]
    for ot in out_cands:                         # prefer wide, resident out tiles
        for bt in _batch_tile_candidates(B, sub):
            if _resident_vmem_bytes(bt, ot, in_p, ci, oi_) <= budget:
                return bt, ot
    return None


def _fit_ktiled(B, in_p, out_p, ci, oi_, budget, k_tile=None):
    sub = _sublane(ci)
    out_cands = [c for c in (256, 128) if out_p % c == 0] or [128]
    if k_tile is not None:
        k_cands = [k_tile]
    else:
        k_cands = [c for c in (2048, 1024, 512, 256, 128) if in_p % c == 0] or [in_p]
    for ot in out_cands:
        for kt in k_cands:
            for bt in _batch_tile_candidates(B, sub):
                if _ktiled_vmem_bytes(bt, ot, kt, ci, oi_) <= budget:
                    return bt, ot, kt
    return _batch_tile_candidates(B, sub)[-1], out_cands[-1], k_cands[-1]


# ---------------------------------------------------------------------------
# Parameter preparation (call once per parameter / noise update)
# ---------------------------------------------------------------------------
def prepare_noisy_linear_params(weight_mu, weight_sigma, bias_mu, bias_sigma,
                                eps_in, eps_out, bias_epsilon, *,
                                compute_dtype=jnp.bfloat16):
    """Pad + cast NoisyLinear params/noise into the kernel layout ONCE.

    The factorized eps_in / eps_out vectors are equivalent to the module's
    weight_epsilon buffer, which reset_noise always fills with
    outer(eps_out, eps_in).  The noisy bias is folded here (same math).
    """
    out_f, in_f = weight_mu.shape
    in_p = _round_up(in_f, 128)
    out_p = _round_up(out_f, 128)

    def pad2(a, rows, cols, dt):
        a = a.astype(dt)
        if a.shape != (rows, cols):
            a = jnp.pad(a, ((0, rows - a.shape[0]), (0, cols - a.shape[1])))
        return a

    bias_noisy = bias_mu + bias_sigma * bias_epsilon          # folded once (f32)
    return dict(
        wmu=pad2(weight_mu, out_p, in_p, compute_dtype),
        wsig=pad2(weight_sigma, out_p, in_p, compute_dtype),
        eps_out=pad2(eps_out.reshape(out_f, 1), out_p, 1, compute_dtype),
        eps_in=pad2(eps_in.reshape(1, in_f), 1, in_p, compute_dtype),
        bias_mu=pad2(bias_mu.reshape(1, out_f), 1, out_p, jnp.float32),
        bias_noisy=pad2(bias_noisy.reshape(1, out_f), 1, out_p, jnp.float32),
        in_features=in_f, out_features=out_f, in_p=in_p, out_p=out_p,
        compute_dtype=jnp.dtype(compute_dtype),
    )


# ---------------------------------------------------------------------------
# Forward wrapper
# ---------------------------------------------------------------------------
def noisy_linear_forward(x, params, *, training=True, k_tile=None,
                         vmem_limit_bytes=None):
    """NoisyLinear.forward on a prepared parameter dict (see prepare_*)."""
    B, in_f = x.shape
    assert in_f == params["in_features"], "in_features mismatch"
    in_p, out_p = params["in_p"], params["out_p"]
    out_f = params["out_features"]
    cdt = params["compute_dtype"]
    out_dtype = x.dtype
    ci = jnp.dtype(cdt).itemsize
    oi_ = jnp.dtype(out_dtype).itemsize

    if vmem_limit_bytes is None:
        vmem_limit_bytes = _vmem_limit_bytes()
    budget = int(0.75 * vmem_limit_bytes)

    if k_tile is not None and in_p % k_tile != 0:
        raise ValueError("k_tile must divide the padded in_features")

    resident = _fit_resident(B, in_p, out_p, ci, oi_, budget) if k_tile is None else None
    if resident is not None:
        b_tile, out_tile = resident
        kt = in_p
    else:
        b_tile, out_tile, kt = _fit_ktiled(B, in_p, out_p, ci, oi_, budget, k_tile)

    b_p = _round_up(B, b_tile)

    # Cast x to the MXU feed dtype once in HBM (no per-tile in-kernel cast);
    # skip padding entirely when batch / feature dims are already aligned.
    xp = x if x.dtype == cdt else x.astype(cdt)
    if (B, in_f) != (b_p, in_p):
        xp = jnp.pad(xp, ((0, b_p - B), (0, in_p - in_f)))

    out_shape = jax.ShapeDtypeStruct((b_p, out_p), out_dtype)

    if resident is not None:
        # ---- K resident: 2-D grid, effective weight hoisted per out tile ----
        grid = (out_p // out_tile, b_p // b_tile)
        x_spec = pl.BlockSpec((b_tile, in_p), lambda oi, bi: (bi, 0))
        w_spec = pl.BlockSpec((out_tile, in_p), lambda oi, bi: (oi, 0))
        eo_spec = pl.BlockSpec((out_tile, 1), lambda oi, bi: (oi, 0))
        ei_spec = pl.BlockSpec((1, in_p), lambda oi, bi: (0, 0))
        brow_spec = pl.BlockSpec((1, out_tile), lambda oi, bi: (0, oi))
        out_spec = pl.BlockSpec((b_tile, out_tile), lambda oi, bi: (bi, oi))
        # TODO(synk): switch to batch-outer / out-inner nesting (x resident)
        #             when B >> out_features so x is streamed from HBM only once.
        if training:
            out = pl.pallas_call(
                _noisy_resident_kernel,
                out_shape=out_shape,
                grid=grid,
                in_specs=[x_spec, w_spec, w_spec, eo_spec, ei_spec, brow_spec],
                out_specs=out_spec,
                scratch_shapes=[pltpu.VMEM((out_tile, in_p), cdt)],
                compiler_params=pltpu.CompilerParams(
                    # Batch axis MUST be "arbitrary": the w_eff scratch is only
                    # (re)built when program_id(1) == 0.
                    dimension_semantics=("parallel", "arbitrary"),
                    vmem_limit_bytes=vmem_limit_bytes),
            )(xp, params["wmu"], params["wsig"], params["eps_out"],
              params["eps_in"], params["bias_noisy"])
        else:
            out = pl.pallas_call(
                _plain_resident_kernel,
                out_shape=out_shape,
                grid=grid,
                in_specs=[x_spec, w_spec, brow_spec],
                out_specs=out_spec,
                compiler_params=pltpu.CompilerParams(
                    dimension_semantics=("parallel", "parallel"),
                    vmem_limit_bytes=vmem_limit_bytes),
            )(xp, params["wmu"], params["bias_mu"])
    else:
        # ---- wide layers: K-tiled reduction with an f32 VMEM accumulator ----
        grid = (out_p // out_tile, b_p // b_tile, in_p // kt)
        x_spec = pl.BlockSpec((b_tile, kt), lambda oi, bi, ki: (bi, ki))
        w_spec = pl.BlockSpec((out_tile, kt), lambda oi, bi, ki: (oi, ki))
        eo_spec = pl.BlockSpec((out_tile, 1), lambda oi, bi, ki: (oi, 0))
        ei_spec = pl.BlockSpec((1, kt), lambda oi, bi, ki: (0, ki))
        brow_spec = pl.BlockSpec((1, out_tile), lambda oi, bi, ki: (0, oi))
        out_spec = pl.BlockSpec((b_tile, out_tile), lambda oi, bi, ki: (bi, oi))
        cparams = pltpu.CompilerParams(
            dimension_semantics=("parallel", "parallel", "arbitrary"),
            vmem_limit_bytes=vmem_limit_bytes)
        acc_scratch = [pltpu.VMEM((b_tile, out_tile), jnp.float32)]
        if training:
            out = pl.pallas_call(
                _noisy_ktiled_kernel,
                out_shape=out_shape,
                grid=grid,
                in_specs=[x_spec, w_spec, w_spec, eo_spec, ei_spec, brow_spec],
                out_specs=out_spec,
                scratch_shapes=acc_scratch,
                compiler_params=cparams,
            )(xp, params["wmu"], params["wsig"], params["eps_out"],
              params["eps_in"], params["bias_noisy"])
        else:
            out = pl.pallas_call(
                _plain_ktiled_kernel,
                out_shape=out_shape,
                grid=grid,
                in_specs=[x_spec, w_spec, brow_spec],
                out_specs=out_spec,
                scratch_shapes=acc_scratch,
                compiler_params=cparams,
            )(xp, params["wmu"], params["bias_mu"])

    if (b_p, out_p) != (B, out_f):
        out = out[:B, :out_f]
    return out


# ---------------------------------------------------------------------------
# Deterministic parameter / noise initialization mirroring the PyTorch module.
# ---------------------------------------------------------------------------
def _scale_noise(key, size):
    x = jax.random.normal(key, (size,), dtype=jnp.float32)
    return jnp.sign(x) * jnp.sqrt(jnp.abs(x))


def init_noisy_linear(key, in_features, out_features, std_init=0.4):
    k_wmu, k_bmu, k_ein, k_eout, k_beps = jax.random.split(key, 5)
    mu_range = 1.0 / math.sqrt(in_features)

    weight_mu = jax.random.uniform(k_wmu, (out_features, in_features),
                                   minval=-mu_range, maxval=mu_range,
                                   dtype=jnp.float32)
    weight_sigma = jnp.full((out_features, in_features),
                            std_init / math.sqrt(in_features), dtype=jnp.float32)
    bias_mu = jax.random.uniform(k_bmu, (out_features,),
                                 minval=-mu_range, maxval=mu_range,
                                 dtype=jnp.float32)
    bias_sigma = jnp.full((out_features,),
                          std_init / math.sqrt(out_features), dtype=jnp.float32)

    eps_in = _scale_noise(k_ein, in_features)       # factorized noise, kept
    eps_out = _scale_noise(k_eout, out_features)    # as vectors (no ger())
    bias_epsilon = _scale_noise(k_beps, out_features)

    return dict(weight_mu=weight_mu, weight_sigma=weight_sigma,
                bias_mu=bias_mu, bias_sigma=bias_sigma,
                eps_in=eps_in, eps_out=eps_out, bias_epsilon=bias_epsilon)


if __name__ == "__main__":
    key = jax.random.PRNGKey(0)
    k_p1, k_x1, k_p2, k_x2 = jax.random.split(key, 4)

    # ---- case 1: DQN-sized layer, K fully resident ----
    batch, in_features, out_features = 8, 32, 64
    p = init_noisy_linear(k_p1, in_features, out_features)
    x = jax.random.normal(k_x1, (batch, in_features), dtype=jnp.float32)

    w_eps = jnp.outer(p["eps_out"], p["eps_in"])            # eps_out.ger(eps_in)
    w_ref = p["weight_mu"] + p["weight_sigma"] * w_eps
    b_ref = p["bias_mu"] + p["bias_sigma"] * p["bias_epsilon"]
    ref_train = x @ w_ref.T + b_ref
    ref_eval = x @ p["weight_mu"].T + p["bias_mu"]

    # exact f32 path
    prep_f32 = prepare_noisy_linear_params(
        p["weight_mu"], p["weight_sigma"], p["bias_mu"], p["bias_sigma"],
        p["eps_in"], p["eps_out"], p["bias_epsilon"],
        compute_dtype=jnp.float32)
    out = jax.block_until_ready(noisy_linear_forward(x, prep_f32, training=True))
    assert out.shape == (batch, out_features)
    assert jnp.allclose(out, ref_train, atol=1e-5, rtol=1e-5)

    out_eval = jax.block_until_ready(noisy_linear_forward(x, prep_f32, training=False))
    assert jnp.allclose(out_eval, ref_eval, atol=1e-5, rtol=1e-5)

    # default bf16 MXU feed (f32 accumulation) -- v6e/v7x fast path
    prep_bf16 = prepare_noisy_linear_params(
        p["weight_mu"], p["weight_sigma"], p["bias_mu"], p["bias_sigma"],
        p["eps_in"], p["eps_out"], p["bias_epsilon"])        # bf16 is the default
    out_bf16 = jax.block_until_ready(noisy_linear_forward(x, prep_bf16, training=True))
    assert jnp.allclose(out_bf16, ref_train, atol=5e-2, rtol=5e-2)

    # ---- case 2: force the K-tiled accumulator path (wide-layer fallback) ----
    b2, in2, out2 = 16, 256, 128
    p2 = init_noisy_linear(k_p2, in2, out2)
    x2 = jax.random.normal(k_x2, (b2, in2), dtype=jnp.float32)
    w2 = p2["weight_mu"] + p2["weight_sigma"] * jnp.outer(p2["eps_out"], p2["eps_in"])
    ref2_train = x2 @ w2.T + (p2["bias_mu"] + p2["bias_sigma"] * p2["bias_epsilon"])
    ref2_eval = x2 @ p2["weight_mu"].T + p2["bias_mu"]

    prep2 = prepare_noisy_linear_params(
        p2["weight_mu"], p2["weight_sigma"], p2["bias_mu"], p2["bias_sigma"],
        p2["eps_in"], p2["eps_out"], p2["bias_epsilon"],
        compute_dtype=jnp.float32)
    out2t = jax.block_until_ready(
        noisy_linear_forward(x2, prep2, training=True, k_tile=128))
    assert jnp.allclose(out2t, ref2_train, atol=1e-4, rtol=1e-4)
    out2e = jax.block_until_ready(
        noisy_linear_forward(x2, prep2, training=False, k_tile=128))
    assert jnp.allclose(out2e, ref2_eval, atol=1e-4, rtol=1e-4)

    print("KERNEL_OK")
</pallas_src>

<mosaic_0001>
module attributes {stable_mosaic.version = 11 : i64} {
  func.func @_noisy_resident_kernel(%arg0: i32, %arg1: i32, %arg2: memref<8x128xf32, #tpu.memory_space<vmem>>, %arg3: memref<128x128xf32, #tpu.memory_space<vmem>>, %arg4: memref<128x128xf32, #tpu.memory_space<vmem>>, %arg5: memref<128x1xf32, #tpu.memory_space<vmem>>, %arg6: memref<1x128xf32, #tpu.memory_space<vmem>>, %arg7: memref<1x128xf32, #tpu.memory_space<vmem>>, %arg8: memref<8x128xf32, #tpu.memory_space<vmem>>, %arg9: memref<128x128xf32, #tpu.memory_space<vmem>>) attributes {dimension_semantics = [#tpu.dimension_semantics<parallel>, #tpu.dimension_semantics<arbitrary>], iteration_bounds = array<i64: 1, 1>, scalar_prefetch = 0 : i64, scratch_operands = 1 : i64, tpu.core_type = #tpu.core_type<tc>, window_params = [{transform_indices = @transform_0, window_bounds = array<i64: 8, 128>}, {transform_indices = @transform_1, window_bounds = array<i64: 128, 128>}, {transform_indices = @transform_2, window_bounds = array<i64: 128, 128>}, {transform_indices = @transform_3, window_bounds = array<i64: 128, 1>}, {pipeline_mode = #tpu.pipeline_mode<synchronous>, transform_indices = @transform_4, window_bounds = array<i64: 1, 128>}, {transform_indices = @transform_5, window_bounds = array<i64: 1, 128>}, {transform_indices = @transform_6, window_bounds = array<i64: 8, 128>}]} {
    %c0_i32 = arith.constant 0 : i32
    %0 = arith.cmpi eq, %arg1, %c0_i32 : i32
    %1 = arith.extui %0 : i1 to i32
    %c0_i32_0 = arith.constant 0 : i32
    %2 = arith.cmpi ne, %1, %c0_i32_0 : i32
    scf.if %2 {
      %c0_8 = arith.constant 0 : index
      %c0_9 = arith.constant 0 : index
      %10 = vector.load %arg3[%c0_8, %c0_9] : memref<128x128xf32, #tpu.memory_space<vmem>>, vector<128x128xf32>
      %c0_10 = arith.constant 0 : index
      %c0_11 = arith.constant 0 : index
      %11 = vector.load %arg4[%c0_10, %c0_11] : memref<128x128xf32, #tpu.memory_space<vmem>>, vector<128x128xf32>
      %c0_12 = arith.constant 0 : index
      %c0_13 = arith.constant 0 : index
      %12 = vector.load %arg5[%c0_12, %c0_13] : memref<128x1xf32, #tpu.memory_space<vmem>>, vector<128x1xf32>
      %c0_14 = arith.constant 0 : index
      %c0_15 = arith.constant 0 : index
      %13 = vector.load %arg6[%c0_14, %c0_15] : memref<1x128xf32, #tpu.memory_space<vmem>>, vector<1x128xf32>
      %14 = vector.broadcast %12 : vector<128x1xf32> to vector<128x128xf32>
      %15 = vector.broadcast %13 : vector<1x128xf32> to vector<128x128xf32>
      %16 = arith.mulf %14, %15 : vector<128x128xf32>
      %17 = arith.mulf %11, %16 : vector<128x128xf32>
      %18 = arith.addf %10, %17 : vector<128x128xf32>
      %c0_16 = arith.constant 0 : index
      %c0_17 = arith.constant 0 : index
      %19 = vector.load %arg9[%c0_16, %c0_17] : memref<128x128xf32, #tpu.memory_space<vmem>>, vector<128x128xf32>
      tpu.vector_store %arg9[%c0_16, %c0_17], %18 {strides = array<i32>} : memref<128x128xf32, #tpu.memory_space<vmem>>, vector<128x128xf32>,
    } else {
    }
    %c0 = arith.constant 0 : index
    %c0_1 = arith.constant 0 : index
    %3 = vector.load %arg2[%c0, %c0_1] : memref<8x128xf32, #tpu.memory_space<vmem>>, vector<8x128xf32>
    %c0_2 = arith.constant 0 : index
    %c0_3 = arith.constant 0 : index
    %4 = vector.load %arg9[%c0_2, %c0_3] : memref<128x128xf32, #tpu.memory_space<vmem>>, vector<128x128xf32>
    %cst = arith.constant dense<0.000000e+00> : vector<8x128xf32>
    %5 = tpu.matmul %3, %4, %cst {dimension_numbers = #tpu.dot_dimension_numbers<[1], [1], [0], [0], [0, 0, 1, 0], [], []>} : vector<8x128xf32>, vector<128x128xf32>, vector<8x128xf32> -> vector<8x128xf32>
    %c0_4 = arith.constant 0 : index
    %c0_5 = arith.constant 0 : index
    %6 = vector.load %arg7[%c0_4, %c0_5] : memref<1x128xf32, #tpu.memory_space<vmem>>, vector<1x128xf32>
    %7 = vector.broadcast %6 : vector<1x128xf32> to vector<8x128xf32>
    %8 = arith.addf %5, %7 : vector<8x128xf32>
    %c0_6 = arith.constant 0 : index
    %c0_7 = arith.constant 0 : index
    %9 = vector.load %arg8[%c0_6, %c0_7] : memref<8x128xf32, #tpu.memory_space<vmem>>, vector<8x128xf32>
    tpu.vector_store %arg8[%c0_6, %c0_7], %8 {strides = array<i32>} : memref<8x128xf32, #tpu.memory_space<vmem>>, vector<8x128xf32>,
    return
  }
  func.func @transform_0(%arg0: i32, %arg1: i32) -> (i32, i32) {
    %c0_i32 = arith.constant 0 : i32
    %c0_i32_0 = arith.constant 0 : i32
    return %arg1, %c0_i32 : i32, i32
  }
  func.func @transform_1(%arg0: i32, %arg1: i32) -> (i32, i32) {
    %c0_i32 = arith.constant 0 : i32
    %c0_i32_0 = arith.constant 0 : i32
    return %arg0, %c0_i32 : i32, i32
  }
  func.func @transform_2(%arg0: i32, %arg1: i32) -> (i32, i32) {
    %c0_i32 = arith.constant 0 : i32
    %c0_i32_0 = arith.constant 0 : i32
    return %arg0, %c0_i32 : i32, i32
  }
  func.func @transform_3(%arg0: i32, %arg1: i32) -> (i32, i32) {
    %c0_i32 = arith.constant 0 : i32
    %c0_i32_0 = arith.constant 0 : i32
    return %arg0, %c0_i32 : i32, i32
  }
  func.func @transform_4(%arg0: i32, %arg1: i32) -> (i32, i32) {
    %c0_i32 = arith.constant 0 : i32
    %c0_i32_0 = arith.constant 0 : i32
    %c0_i32_1 = arith.constant 0 : i32
    return %c0_i32, %c0_i32_0 : i32, i32
  }
  func.func @transform_5(%arg0: i32, %arg1: i32) -> (i32, i32) {
    %c0_i32 = arith.constant 0 : i32
    %c0_i32_0 = arith.constant 0 : i32
    return %c0_i32, %arg0 : i32, i32
  }
  func.func @transform_6(%arg0: i32, %arg1: i32) -> (i32, i32) {
    %c0_i32 = arith.constant 0 : i32
    return %arg1, %arg0 : i32, i32
  }
}

</mosaic_0001>

<llo_original>
// kernel: tpu_custom_call.1
$region0: #{tpu_custom_call.1}
  #allocation0 [shape = 'u32[]', space=smem, size = 0x4, offset = 0x4, fixed_abs, tag = 'smem constant byte address 0x4 - core index']
  #allocation1 [shape = 'u32[144,128]{1,0:T(1,128)}', space=vmem, size = 0x12000, scoped, tag = 'internal scratch']
  #allocation2 [shape = 'f32[128,128]{1,0:T(8,128)}', space=vmem, size = 0x10000, scoped, tag = 'scratch operand']
  %s0 = inlined_call_operand.hbm [shape: f32[8,128], index: 0, kind: input, shape index: {}]
  %s1 = inlined_call_operand.vmem [shape: f32[128,128], index: 1, kind: input, shape index: {}]
  %s2 = inlined_call_operand.hbm [shape: f32[128,128], index: 2, kind: input, shape index: {}]
  %s3 = inlined_call_operand.vmem [shape: f32[128,1], index: 3, kind: input, shape index: {}]
  %s4 = inlined_call_operand.vmem [shape: f32[1,128], index: 4, kind: input, shape index: {}]
  %s5 = inlined_call_operand.vmem [shape: f32[1,128], index: 5, kind: input, shape index: {}]
  %s6 = inlined_call_operand.hbm [shape: f32[8,128], index: 6, kind: output, shape index: {}]
  %s7 = sld [smem:[#allocation0]]
  $region46: #{tpu_custom_call.1} parent=0
    _
  %s9 = ssub.s32 1, %s7
  %s10 = scalar_select 0, %s9, %s7
  $region1: #{tpu_custom_call.1} parent=0
    #allocation3 [shape = 'u8[4096]{0}', space=vmem, size = 0x1000, scoped, tag = 'input window, operand 0, single buffered']
    #allocation4 [shape = 's32[1]{0}', space=sflag, size = 0x4, scoped, tag = 'scoped memory for tpu_custom_call.1']
    #allocation5 [shape = 's32[1]{0}', space=sflag, size = 0x4, scoped, tag = 'scoped memory for tpu_custom_call.1']
    #allocation6 [shape = 'u8[65536]{0}', space=vmem, size = 0x10000, scoped, tag = 'input window, operand 2, single buffered']
    #allocation7 [shape = 's32[1]{0}', space=sflag, size = 0x4, scoped, tag = 'scoped memory for tpu_custom_call.1']
    #allocation8 [shape = 'u8[4096]{0}', space=vmem, size = 0x1000, scoped, tag = 'output window, operand 0, single buffered']
    %11 = vsyncpa [#allocation4], 0
    %12 = vsyncpa [#allocation7], 0
    %13 = vsyncpa [#allocation5], 0
    // Predicated region
    $region2: #{tpu_custom_call.1} parent=1 // pred_check
      _
    $region3: #{tpu_custom_call.1} parent=1 // pred_check_branch
      %15 = sbr.rel (0) target = $region5
    $region4: #{tpu_custom_call.1} parent=1 // pred_region
      %s17 = ssub.s32 128, 128
      %18 = vsyncadd [#allocation4], %s17
      %s20 = sshll.u32 [#allocation3], 4
      %s21 = int_to_ptr.vmem [resolvable:$true] %s20
      %23 = dma.hbm_to_vmem [thread:$0]  %s0, 128, %s21, [#allocation4]
    $region5: #{tpu_custom_call.1} parent=1 // pred_fallthru
      _
    // Predicated region
    $region6: #{tpu_custom_call.1} parent=1 // pred_check
      _
    $region7: #{tpu_custom_call.1} parent=1 // pred_check_branch
      %25 = sbr.rel (0) target = $region9
    $region8: #{tpu_custom_call.1} parent=1 // pred_region
      _
    $region9: #{tpu_custom_call.1} parent=1 // pred_fallthru
      _
    // Predicated region
    $region10: #{tpu_custom_call.1} parent=1 // pred_check
      _
    $region11: #{tpu_custom_call.1} parent=1 // pred_check_branch
      %27 = sbr.rel (0) target = $region13
    $region12: #{tpu_custom_call.1} parent=1 // pred_region
      %s29 = ssub.s32 2048, 2048
      %30 = vsyncadd [#allocation7], %s29
      %s31 = sshll.u32 [#allocation6], 4
      %s32 = int_to_ptr.vmem [resolvable:$true] %s31
      %37 = dma.hbm_to_vmem [thread:$0]  %s2, 2048, %s32, [#allocation7], 128, 128, 8
    $region13: #{tpu_custom_call.1} parent=1 // pred_fallthru
      _
    // Predicated region
    $region14: #{tpu_custom_call.1} parent=1 // pred_check
      _
    $region15: #{tpu_custom_call.1} parent=1 // pred_check_branch
      %39 = sbr.rel (0) target = $region17
    $region16: #{tpu_custom_call.1} parent=1 // pred_region
      _
    $region17: #{tpu_custom_call.1} parent=1 // pred_fallthru
      _
    // Predicated region
    $region18: #{tpu_custom_call.1} parent=1 // pred_check
      _
    $region19: #{tpu_custom_call.1} parent=1 // pred_check_branch
      %41 = sbr.rel (0) target = $region21
    $region20: #{tpu_custom_call.1} parent=1 // pred_region
      _
    $region21: #{tpu_custom_call.1} parent=1 // pred_fallthru
      _
    // Predicated region
    $region22: #{tpu_custom_call.1} parent=1 // pred_check
      _
    $region23: #{tpu_custom_call.1} parent=1 // pred_check_branch
      %43 = sbr.rel (0) target = $region25
    $region24: #{tpu_custom_call.1} parent=1 // pred_region
      _
    $region25: #{tpu_custom_call.1} parent=1 // pred_fallthru
      _
    // Predicated region
    $region26: #{tpu_custom_call.1} parent=1 // pred_check
      _
    $region27: #{tpu_custom_call.1} parent=1 // pred_check_branch
      %45 = sbr.rel (0) target = $region29
    $region28: #{tpu_custom_call.1} parent=1 // pred_region
      %46 = dma.done [#allocation4], 128
    $region29: #{tpu_custom_call.1} parent=1 // pred_fallthru
      _
    // Predicated region
    $region30: #{tpu_custom_call.1} parent=1 // pred_check
      _
    $region31: #{tpu_custom_call.1} parent=1 // pred_check_branch
      %48 = sbr.rel (0) target = $region33
    $region32: #{tpu_custom_call.1} parent=1 // pred_region
      %49 = dma.done [#allocation7], 2048
    $region33: #{tpu_custom_call.1} parent=1 // pred_fallthru
      _
    %p50 = scmp.eq.s32.totalorder 0, 0
    // Predicated region
    $region34: #{tpu_custom_call.1} parent=1 // pred_check
      %p51 = pneg %p50
    $region35: #{tpu_custom_call.1} parent=1 // pred_check_branch
      %53 = sbr.rel (%p51) target = $region37
    $region36: #{tpu_custom_call.1} parent=1 // pred_region
      %v54 = vld [vmem:[%s1] sm:$0xff]
      %v55 = vld [vmem:[%s1 + $0x8] sm:$0xff]
      %v56 = vld [vmem:[%s1 + $0x10] sm:$0xff]
      %v57 = vld [vmem:[%s1 + $0x18] sm:$0xff]
      %v58 = vld [vmem:[%s1 + $0x20] sm:$0xff]
      %v59 = vld [vmem:[%s1 + $0x28] sm:$0xff]
      %v60 = vld [vmem:[%s1 + $0x30] sm:$0xff]
      %v61 = vld [vmem:[%s1 + $0x38] sm:$0xff]
      %v62 = vld [vmem:[%s1 + $0x40] sm:$0xff]
      %v63 = vld [vmem:[%s1 + $0x48] sm:$0xff]
      %v64 = vld [vmem:[%s1 + $0x50] sm:$0xff]
      %v65 = vld [vmem:[%s1 + $0x58] sm:$0xff]
      %v66 = vld [vmem:[%s1 + $0x60] sm:$0xff]
      %v67 = vld [vmem:[%s1 + $0x68] sm:$0xff]
      %v68 = vld [vmem:[%s1 + $0x70] sm:$0xff]
      %v69 = vld [vmem:[%s1 + $0x78] sm:$0xff]
      %v70 = vld [vmem:[#allocation6] sm:$0xff]
      %v71 = vld [vmem:[#allocation6 + $0x8] sm:$0xff]
      %v72 = vld [vmem:[#allocation6 + $0x10] sm:$0xff]
      %v73 = vld [vmem:[#allocation6 + $0x18] sm:$0xff]
      %v74 = vld [vmem:[#allocation6 + $0x20] sm:$0xff]
      %v75 = vld [vmem:[#allocation6 + $0x28] sm:$0xff]
      %v76 = vld [vmem:[#allocation6 + $0x30] sm:$0xff]
      %v77 = vld [vmem:[#allocation6 + $0x38] sm:$0xff]
      %v78 = vld [vmem:[#allocation6 + $0x40] sm:$0xff]
      %v79 = vld [vmem:[#allocation6 + $0x48] sm:$0xff]
      %v80 = vld [vmem:[#allocation6 + $0x50] sm:$0xff]
      %v81 = vld [vmem:[#allocation6 + $0x58] sm:$0xff]
      %v82 = vld [vmem:[#allocation6 + $0x60] sm:$0xff]
      %v83 = vld [vmem:[#allocation6 + $0x68] sm:$0xff]
      %v84 = vld [vmem:[#allocation6 + $0x70] sm:$0xff]
      %v85 = vld [vmem:[#allocation6 + $0x78] sm:$0xff]
      %v86 = vld [vmem:[%s3] sm:$0xff]
      %v87 = vld [vmem:[%s3 + $0x8] sm:$0xff]
      %v88 = vld [vmem:[%s3 + $0x10] sm:$0xff]
      %v89 = vld [vmem:[%s3 + $0x18] sm:$0xff]
      %v90 = vld [vmem:[%s3 + $0x20] sm:$0xff]
      %v91 = vld [vmem:[%s3 + $0x28] sm:$0xff]
      %v92 = vld [vmem:[%s3 + $0x30] sm:$0xff]
      %v93 = vld [vmem:[%s3 + $0x38] sm:$0xff]
      %v94 = vld [vmem:[%s3 + $0x40] sm:$0xff]
      %v95 = vld [vmem:[%s3 + $0x48] sm:$0xff]
      %v96 = vld [vmem:[%s3 + $0x50] sm:$0xff]
      %v97 = vld [vmem:[%s3 + $0x58] sm:$0xff]
      %v98 = vld [vmem:[%s3 + $0x60] sm:$0xff]
      %v99 = vld [vmem:[%s3 + $0x68] sm:$0xff]
      %v100 = vld [vmem:[%s3 + $0x70] sm:$0xff]
      %v101 = vld [vmem:[%s3 + $0x78] sm:$0xff]
      %v102 = vld [vmem:[%s4] sm:$0x1]
      %104 = vset.pattern.permute.xlu0 0
      %105 = vperm.xlu0 %104, %v86
      %v106 = vpop.permute.xlu0 %105
      %109 = vset.pattern.permute.xlu0 0
      %110 = vperm.xlu0 %109, %v87
      %v111 = vpop.permute.xlu0 %110
      %114 = vset.pattern.permute.xlu0 0
      %115 = vperm.xlu0 %114, %v88
      %v116 = vpop.permute.xlu0 %115
      %119 = vset.pattern.permute.xlu0 0
      %120 = vperm.xlu0 %119, %v89
      %v121 = vpop.permute.xlu0 %120
      %124 = vset.pattern.permute.xlu0 0
      %125 = vperm.xlu0 %124, %v90
      %v126 = vpop.permute.xlu0 %125
      %129 = vset.pattern.permute.xlu0 0
      %130 = vperm.xlu0 %129, %v91
      %v131 = vpop.permute.xlu0 %130
      %134 = vset.pattern.permute.xlu0 0
      %135 = vperm.xlu0 %134, %v92
      %v136 = vpop.permute.xlu0 %135
      %139 = vset.pattern.permute.xlu0 0
      %140 = vperm.xlu0 %139, %v93
      %v141 = vpop.permute.xlu0 %140
      %144 = vset.pattern.permute.xlu0 0
      %145 = vperm.xlu0 %144, %v94
      %v146 = vpop.permute.xlu0 %145
      %149 = vset.pattern.permute.xlu0 0
      %150 = vperm.xlu0 %149, %v95
      %v151 = vpop.permute.xlu0 %150
      %154 = vset.pattern.permute.xlu0 0
      %155 = vperm.xlu0 %154, %v96
      %v156 = vpop.permute.xlu0 %155
      %159 = vset.pattern.permute.xlu0 0
      %160 = vperm.xlu0 %159, %v97
      %v161 = vpop.permute.xlu0 %160
      %164 = vset.pattern.permute.xlu0 0
      %165 = vperm.xlu0 %164, %v98
      %v166 = vpop.permute.xlu0 %165
      %169 = vset.pattern.permute.xlu0 0
      %170 = vperm.xlu0 %169, %v99
      %v171 = vpop.permute.xlu0 %170
      %174 = vset.pattern.permute.xlu0 0
      %175 = vperm.xlu0 %174, %v100
      %v176 = vpop.permute.xlu0 %175
      %179 = vset.pattern.permute.xlu0 0
      %180 = vperm.xlu0 %179, %v101
      %v181 = vpop.permute.xlu0 %180
      %v184 = vlaneseq
      %v185 = vshrl.u32 %v184, 7
      %v186 = vsub.s32 0, %v185
      %v187 = vrot.slane %v102, %v186
      %v189 = vmul.f32 %v106, %v187
      %v190 = vmul.f32 %v111, %v187
      %v191 = vmul.f32 %v116, %v187
      %v192 = vmul.f32 %v121, %v187
      %v193 = vmul.f32 %v126, %v187
      %v194 = vmul.f32 %v131, %v187
      %v195 = vmul.f32 %v136, %v187
      %v196 = vmul.f32 %v141, %v187
      %v197 = vmul.f32 %v146, %v187
      %v198 = vmul.f32 %v151, %v187
      %v199 = vmul.f32 %v156, %v187
      %v200 = vmul.f32 %v161, %v187
      %v201 = vmul.f32 %v166, %v187
      %v202 = vmul.f32 %v171, %v187
      %v203 = vmul.f32 %v176, %v187
      %v204 = vmul.f32 %v181, %v187
      %v205 = vmul.f32 %v70, %v189
      %v206 = vmul.f32 %v71, %v190
      %v207 = vmul.f32 %v72, %v191
      %v208 = vmul.f32 %v73, %v192
      %v209 = vmul.f32 %v74, %v193
      %v210 = vmul.f32 %v75, %v194
      %v211 = vmul.f32 %v76, %v195
      %v212 = vmul.f32 %v77, %v196
      %v213 = vmul.f32 %v78, %v197
      %v214 = vmul.f32 %v79, %v198
      %v215 = vmul.f32 %v80, %v199
      %v216 = vmul.f32 %v81, %v200
      %v217 = vmul.f32 %v82, %v201
      %v218 = vmul.f32 %v83, %v202
      %v219 = vmul.f32 %v84, %v203
      %v220 = vmul.f32 %v85, %v204
      %v221 = vadd.f32 %v54, %v205
      %v222 = vadd.f32 %v55, %v206
      %v223 = vadd.f32 %v56, %v207
      %v224 = vadd.f32 %v57, %v208
      %v225 = vadd.f32 %v58, %v209
      %v226 = vadd.f32 %v59, %v210
      %v227 = vadd.f32 %v60, %v211
      %v228 = vadd.f32 %v61, %v212
      %v229 = vadd.f32 %v62, %v213
      %v230 = vadd.f32 %v63, %v214
      %v231 = vadd.f32 %v64, %v215
      %v232 = vadd.f32 %v65, %v216
      %v233 = vadd.f32 %v66, %v217
      %v234 = vadd.f32 %v67, %v218
      %v235 = vadd.f32 %v68, %v219
      %v236 = vadd.f32 %v69, %v220
      %237 = vst [vmem:[#allocation2] sm:$0xff] %v221
      %238 = vst [vmem:[#allocation2 + $0x8] sm:$0xff] %v222
      %239 = vst [vmem:[#allocation2 + $0x10] sm:$0xff] %v223
      %240 = vst [vmem:[#allocation2 + $0x18] sm:$0xff] %v224
      %241 = vst [vmem:[#allocation2 + $0x20] sm:$0xff] %v225
      %242 = vst [vmem:[#allocation2 + $0x28] sm:$0xff] %v226
      %243 = vst [vmem:[#allocation2 + $0x30] sm:$0xff] %v227
      %244 = vst [vmem:[#allocation2 + $0x38] sm:$0xff] %v228
      %245 = vst [vmem:[#allocation2 + $0x40] sm:$0xff] %v229
      %246 = vst [vmem:[#allocation2 + $0x48] sm:$0xff] %v230
      %247 = vst [vmem:[#allocation2 + $0x50] sm:$0xff] %v231
      %248 = vst [vmem:[#allocation2 + $0x58] sm:$0xff] %v232
      %249 = vst [vmem:[#allocation2 + $0x60] sm:$0xff] %v233
      %250 = vst [vmem:[#allocation2 + $0x68] sm:$0xff] %v234
      %251 = vst [vmem:[#allocation2 + $0x70] sm:$0xff] %v235
      %252 = vst [vmem:[#allocation2 + $0x78] sm:$0xff] %v236
    $region37: #{tpu_custom_call.1} parent=1 // pred_fallthru
      _
    %v253 = vld [vmem:[#allocation3] sm:$0xff]
    %v254 = vld [vmem:[#allocation2] sm:$0xff]
    %v255 = vld [vmem:[#allocation2 + $0x8] sm:$0xff]
    %v256 = vld [vmem:[#allocation2 + $0x10] sm:$0xff]
    %v257 = vld [vmem:[#allocation2 + $0x18] sm:$0xff]
    %v258 = vld [vmem:[#allocation2 + $0x20] sm:$0xff]
    %v259 = vld [vmem:[#allocation2 + $0x28] sm:$0xff]
    %v260 = vld [vmem:[#allocation2 + $0x30] sm:$0xff]
    %v261 = vld [vmem:[#allocation2 + $0x38] sm:$0xff]
    %v262 = vld [vmem:[#allocation2 + $0x40] sm:$0xff]
    %v263 = vld [vmem:[#allocation2 + $0x48] sm:$0xff]
    %v264 = vld [vmem:[#allocation2 + $0x50] sm:$0xff]
    %v265 = vld [vmem:[#allocation2 + $0x58] sm:$0xff]
    %v266 = vld [vmem:[#allocation2 + $0x60] sm:$0xff]
    %v267 = vld [vmem:[#allocation2 + $0x68] sm:$0xff]
    %v268 = vld [vmem:[#allocation2 + $0x70] sm:$0xff]
    %v269 = vld [vmem:[#allocation2 + $0x78] sm:$0xff]
    %v270 = vld [vmem:[%s5] sm:$0x1]
    %v272 = vlaneseq
    %v273 = vshrl.u32 %v272, 7
    %v274 = vsub.s32 0, %v273
    %v275 = vrot.slane %v270, %v274
    %277 = vmatprep.subr.mxu0 0.0
    %278 = vmatpush1.xpose.msra.mxu0 %v269
    %279 = vmatprep.subr.mxu0 0.0
    %280 = vmatpush1.xpose.msra.mxu0 %v268
    %281 = vmatprep.subr.mxu0 0.0
    %282 = vmatpush1.xpose.msra.mxu0 %v267
    %283 = vmatprep.subr.mxu0 0.0
    %284 = vmatpush1.xpose.msra.mxu0 %v266
    %285 = vmatprep.subr.mxu0 0.0
    %286 = vmatpush1.xpose.msra.mxu0 %v265
    %287 = vmatprep.subr.mxu0 0.0
    %288 = vmatpush1.xpose.msra.mxu0 %v264
    %289 = vmatprep.subr.mxu0 0.0
    %290 = vmatpush1.xpose.msra.mxu0 %v263
    %291 = vmatprep.subr.mxu0 0.0
    %292 = vmatpush1.xpose.msra.mxu0 %v262
    %293 = vmatprep.subr.mxu0 0.0
    %294 = vmatpush1.xpose.msra.mxu0 %v261
    %295 = vmatprep.subr.mxu0 0.0
    %296 = vmatpush1.xpose.msra.mxu0 %v260
    %297 = vmatprep.subr.mxu0 0.0
    %298 = vmatpush1.xpose.msra.mxu0 %v259
    %299 = vmatprep.subr.mxu0 0.0
    %300 = vmatpush1.xpose.msra.mxu0 %v258
    %301 = vmatprep.subr.mxu0 0.0
    %302 = vmatpush1.xpose.msra.mxu0 %v257
    %303 = vmatprep.subr.mxu0 0.0
    %304 = vmatpush1.xpose.msra.mxu0 %v256
    %305 = vmatprep.subr.mxu0 0.0
    %306 = vmatpush1.xpose.msra.mxu0 %v255
    %307 = vmatprep.subr.mxu0 0.0
    %308 = vmatpush1.xpose.msra.mxu0 %v254
    %309 = vmatprep.subr.mxu0 0.0
    %310 = vmatpush2.xpose.msra.mxu0 0.0
    %311 = vmatprep.subr.mxu0 0.0
    %312 = vmatpush2.xpose.msra.mxu0 0.0
    %313 = vmatprep.subr.mxu0 0.0
    %314 = vmatpush2.xpose.msra.mxu0 0.0
    %315 = vmatprep.subr.mxu0 0.0
    %316 = vmatpush2.xpose.msra.mxu0 0.0
    %317 = vmatprep.subr.mxu0 0.0
    %318 = vmatpush2.xpose.msra.mxu0 0.0
    %319 = vmatprep.subr.mxu0 0.0
    %320 = vmatpush2.xpose.msra.mxu0 0.0
    %321 = vmatprep.subr.mxu0 0.0
    %322 = vmatpush2.xpose.msra.mxu0 0.0
    %323 = vmatprep.subr.mxu0 0.0
    %324 = vmatpush2.xpose.msra.mxu0 0.0
    %325 = vmatprep.subr.mxu0 0.0
    %326 = vmatpush2.xpose.msra.mxu0 0.0
    %327 = vmatprep.subr.mxu0 0.0
    %328 = vmatpush2.xpose.msra.mxu0 0.0
    %329 = vmatprep.subr.mxu0 0.0
    %330 = vmatpush2.xpose.msra.mxu0 0.0
    %331 = vmatprep.subr.mxu0 0.0
    %332 = vmatpush2.xpose.msra.mxu0 0.0
    %333 = vmatprep.subr.mxu0 0.0
    %334 = vmatpush2.xpose.msra.mxu0 0.0
    %335 = vmatprep.subr.mxu0 0.0
    %336 = vmatpush2.xpose.msra.mxu0 0.0
    %337 = vmatprep.subr.mxu0 0.0
    %338 = vmatpush2.xpose.msra.mxu0 0.0
    %339 = vmatprep.subr.mxu0 0.0
    %340 = vmatpush2.xpose.msra.mxu0 0.0
    %341 = vmatprep.mubr.f32.mxu0 0.0
    %342 = vmatmul.mubr.f32.gmra.mxu0 %v253
    %v343 = vpop.f32.mrf.mxu0
    %v344 = vadd.f32 %v275, %v343
    %v345 = vpop.f32.mrf.mxu0
    %346 = vdwg.mxu0
    %347 = vst [vmem:[#allocation8] sm:$0xff] %v344
    // Predicated region
    $region38: #{tpu_custom_call.1} parent=1 // pred_check
      _
    $region39: #{tpu_custom_call.1} parent=1 // pred_check_branch
      %349 = sbr.rel (0) target = $region41
    $region40: #{tpu_custom_call.1} parent=1 // pred_region
      %s351 = ssub.s32 128, 128
      %352 = vsyncadd [#allocation5], %s351
      %s354 = sshll.u32 [#allocation8], 4
      %s355 = int_to_ptr.vmem [resolvable:$true] %s354
      %357 = dma.vmem_to_hbm [thread:$0]  %s355, 128, %s6, [#allocation5]
    $region41: #{tpu_custom_call.1} parent=1 // pred_fallthru
      _
    // Predicated region
    $region42: #{tpu_custom_call.1} parent=1 // pred_check
      _
    $region43: #{tpu_custom_call.1} parent=1 // pred_check_branch
      %359 = sbr.rel (0) target = $region45
    $region44: #{tpu_custom_call.1} parent=1 // pred_region
      %360 = dma.done [#allocation5], 128
    $region45: #{tpu_custom_call.1} parent=1 // pred_fallthru
      _
    %361 = vsyncpa [#allocation4], 1
    %362 = vsyncpa [#allocation7], 1
    %363 = vsyncpa [#allocation5], 1

</llo_original>
